<compile_context>
chip_gen: v7x
topology: tpu7x:2x2x1
jax: 0.10.0
libtpu: 0.0.40
codegen_flags: <defaults>
</compile_context>

<pallas_src>
import functools
import math

import jax
import jax.numpy as jnp
from jax.experimental import pallas as pl
from jax.experimental.pallas import tpu as pltpu


_MAX_BLOCK_ELEMS = 1 << 20          # ~4 MiB f32 per array per block
_VMEM_LIMIT_BYTES = 32 * 1024 * 1024


def _round_up(a, b):
    return (a + b - 1) // b * b


def _cdiv(a, b):
    return -(-a // b)


def _sublane_tile(dtype):
    # Native second-minor tile per element width: f32 -> 8, bf16 -> 16, int8/fp8 -> 32.
    return {1: 32, 2: 16, 4: 8}.get(jnp.dtype(dtype).itemsize, 8)


def _focal_block(x, t, *, alpha, gamma, hard_targets):
    """Elementwise focal loss for one tile (f32 math)."""
    x = x.astype(jnp.float32)
    t = t.astype(jnp.float32)

    # 1 - p_t = x + t*(1 - 2x)   (p_t = t*x + (1-t)*(1-x))
    one_minus_pt = x + t * (1.0 - 2.0 * x)

    if hard_targets:
        # Valid only for t in {0,1}: single log -> halves EUP (transcendental) work.
        bce = -jnp.maximum(jnp.log(1.0 - one_minus_pt), -100.0)
    else:
        # PyTorch F.binary_cross_entropy clamps each log term at -100.
        log_x = jnp.maximum(jnp.log(x), -100.0)
        log_1mx = jnp.maximum(jnp.log(1.0 - x), -100.0)
        bce = -(t * (log_x - log_1mx) + log_1mx)

    # alpha_factor = t*alpha + (1-t)*(1-alpha), constants folded at trace time.
    alpha_factor = (1.0 - alpha) + t * (2.0 * alpha - 1.0)

    if isinstance(gamma, int):
        modulating = one_minus_pt ** gamma            # integer_pow -> VALU multiplies
    else:
        # float exponent lowers to exp(gamma*log(.)); guard tiny negatives.
        modulating = jnp.maximum(one_minus_pt, 0.0) ** gamma

    return bce * alpha_factor * modulating


def _focal_elementwise_kernel(x_ref, t_ref, o_ref, *, alpha, gamma, hard_targets):
    o_ref[...] = _focal_block(
        x_ref[...], t_ref[...], alpha=alpha, gamma=gamma, hard_targets=hard_targets
    ).astype(o_ref.dtype)


def _focal_reduce_kernel(x_ref, t_ref, o_ref, acc_ref, *, alpha, gamma, hard_targets,
                         valid_rows, block_rows, inner_blocks, needs_mask):
    j = pl.program_id(1)   # reduction ('arbitrary') axis

    @pl.when(j == 0)
    def _():
        acc_ref[...] = jnp.zeros_like(acc_ref)

    loss = _focal_block(
        x_ref[...], t_ref[...], alpha=alpha, gamma=gamma, hard_targets=hard_targets)

    if needs_mask:
        # Mask rows past the end of the array (partial tail block and/or the
        # redundant clamped block that pads the 2-D grid).  jnp.where discards
        # any NaN/inf computed from the undefined out-of-bounds input data.
        blk = pl.program_id(0) * inner_blocks + j          # unclamped global block id
        row_ids = blk * block_rows + jax.lax.broadcasted_iota(jnp.int32, loss.shape, 0)
        loss = jnp.where(row_ids < valid_rows, loss, 0.0)

    # Per-lane f32 accumulation: one sublane reduce per step, no lane reduce,
    # no scalar read-modify-write on the output.
    acc_ref[0:1, :] += jnp.sum(loss, axis=0, keepdims=True)

    @pl.when(j == inner_blocks - 1)
    def _():
        o_ref[...] = acc_ref[...]


def focal_loss(inputs, targets, *, alpha=0.25, gamma=2, reduction="none",
               hard_targets=False, min_pallas_elements=16384):
    """Focal loss on TPU. inputs: probabilities; targets: labels; any shape.

    hard_targets=True uses a single-log BCE that is only correct for exact
    0/1 labels (do NOT use with soft / label-smoothed targets).
    """
    assert inputs.shape == targets.shape
    orig_shape = inputs.shape
    total = math.prod(orig_shape) if orig_shape else 1

    alpha = float(alpha)
    if isinstance(gamma, float) and gamma.is_integer():
        gamma = int(gamma)   # keep (1-p_t)**gamma on the integer_pow (VALU) path

    # Fallback: tiny problems (pallas_call overhead cannot be amortized) or
    # totals not divisible by 128 (would require a pad copy -> plain fused XLA
    # elementwise is cheaper and exact).
    if total < min_pallas_elements or total % 128 != 0:
        loss = _focal_block(inputs, targets, alpha=alpha, gamma=gamma,
                            hard_targets=hard_targets)
        if reduction == "mean":
            return loss.mean().astype(inputs.dtype)
        if reduction == "sum":
            return loss.sum().astype(inputs.dtype)
        return loss.astype(inputs.dtype)

    # ---- free lane-dense reshape (no padding, no copies) ----
    lanes = 512 if total % 512 == 0 else (256 if total % 256 == 0 else 128)
    rows = total // lanes

    sub = max(_sublane_tile(inputs.dtype), _sublane_tile(targets.dtype))
    max_rows = max(sub, (_MAX_BLOCK_ELEMS // lanes) // sub * sub)

    if rows < sub:
        block_rows = rows                       # full-dim block (exempt from tiling rule)
    else:
        block_rows = min(max_rows, (rows // sub) * sub)
        # At least 2 grid steps when there's enough work: v7x shards 'parallel'
        # grid axes across its 2 TensorCores.
        if _cdiv(rows, block_rows) < 2 and rows >= 2 * sub:
            block_rows = _round_up(_cdiv(rows, 2), sub)
    num_blocks = _cdiv(rows, block_rows)

    x2d = inputs.reshape(rows, lanes)
    t2d = targets.reshape(rows, lanes)
    in_bytes = total * (x2d.dtype.itemsize + t2d.dtype.itemsize)
    transc = (1 if hard_targets else 2) * total

    if reduction in ("mean", "sum"):
        num_splits = 2 if num_blocks >= 2 else 1        # one partial per v7x core
        inner_blocks = _cdiv(num_blocks, num_splits)
        padded_grid = num_splits * inner_blocks != num_blocks
        needs_mask = (rows % block_rows != 0) or padded_grid

        def in_map(p, j):
            blk = p * inner_blocks + j
            if padded_grid:
                # Clamp the DMA of the (at most one) redundant grid block; its
                # contribution is zeroed by the in-kernel row mask.
                blk = jnp.minimum(blk, num_blocks - 1)
            return (blk, 0)

        kernel = functools.partial(
            _focal_reduce_kernel, alpha=alpha, gamma=gamma, hard_targets=hard_targets,
            valid_rows=rows, block_rows=block_rows, inner_blocks=inner_blocks,
            needs_mask=needs_mask)

        partials = pl.pallas_call(
            kernel,
            out_shape=jax.ShapeDtypeStruct((num_splits * 8, lanes), jnp.float32),
            grid_spec=pltpu.PrefetchScalarGridSpec(
                num_scalar_prefetch=0,
                grid=(num_splits, inner_blocks),
                in_specs=[pl.BlockSpec((block_rows, lanes), in_map),
                          pl.BlockSpec((block_rows, lanes), in_map)],
                out_specs=pl.BlockSpec((8, lanes), lambda p, j: (p, 0)),
                scratch_shapes=[pltpu.VMEM((8, lanes), jnp.float32)]),
            compiler_params=pltpu.CompilerParams(
                dimension_semantics=("parallel", "arbitrary"),
                vmem_limit_bytes=_VMEM_LIMIT_BYTES),
            cost_estimate=pl.CostEstimate(flops=12 * total, transcendentals=transc,
                                          bytes_accessed=in_bytes),
        )(x2d, t2d)

        s = jnp.sum(partials)                  # tiny (num_splits*8, lanes) array
        if reduction == "mean":
            s = s / total
        return s.astype(inputs.dtype)

    # ---- reduction='none': elementwise, masked partial tail store ----
    kernel = functools.partial(_focal_elementwise_kernel, alpha=alpha, gamma=gamma,
                               hard_targets=hard_targets)
    out2d = pl.pallas_call(
        kernel,
        out_shape=jax.ShapeDtypeStruct((rows, lanes), inputs.dtype),
        grid_spec=pltpu.PrefetchScalarGridSpec(
            num_scalar_prefetch=0,
            grid=(num_blocks,),
            in_specs=[pl.BlockSpec((block_rows, lanes), lambda i: (i, 0)),
                      pl.BlockSpec((block_rows, lanes), lambda i: (i, 0))],
            out_specs=pl.BlockSpec((block_rows, lanes), lambda i: (i, 0)),
        ),
        compiler_params=pltpu.CompilerParams(
            dimension_semantics=("parallel",),
            vmem_limit_bytes=_VMEM_LIMIT_BYTES),
        cost_estimate=pl.CostEstimate(
            flops=12 * total, transcendentals=transc,
            bytes_accessed=in_bytes + total * inputs.dtype.itemsize),
    )(x2d, t2d)

    return out2d.reshape(orig_shape)           # free reshape (no slice, no copy)


def _focal_loss_ref(inputs, targets, alpha=0.25, gamma=2):
    x = inputs.astype(jnp.float32)
    t = targets.astype(jnp.float32)
    bce = -(t * jnp.maximum(jnp.log(x), -100.0)
            + (1.0 - t) * jnp.maximum(jnp.log(1.0 - x), -100.0))
    p_t = t * x + (1.0 - t) * (1.0 - x)
    alpha_factor = t * alpha + (1.0 - t) * (1.0 - alpha)
    return (bce * alpha_factor * (1.0 - p_t) ** gamma).astype(inputs.dtype)


if __name__ == "__main__":
    key = jax.random.PRNGKey(0)
    k1, k2, k3, k4, k5, k6 = jax.random.split(key, 6)

    # Small shape from the spec; force the Pallas path even at this size.
    B, C, H, W = 2, 4, 16, 16
    x = jax.nn.sigmoid(jax.random.normal(k1, (B, C, H, W), dtype=jnp.float32))
    t = (jax.random.uniform(k2, (B, C, H, W)) > 0.5).astype(jnp.float32)
    out = jax.block_until_ready(
        focal_loss(x, t, alpha=0.25, gamma=2, reduction="none", min_pallas_elements=0))
    ref = _focal_loss_ref(x, t)
    assert out.shape == x.shape and out.dtype == x.dtype
    assert jnp.allclose(out, ref, atol=1e-5, rtol=1e-5)

    # Larger shape: multi-block 'parallel' grid + fused 2-core reductions.
    x2 = jax.nn.sigmoid(jax.random.normal(k3, (4, 8, 64, 64), dtype=jnp.float32))
    t2 = (jax.random.uniform(k4, (4, 8, 64, 64)) > 0.5).astype(jnp.float32)
    ref2 = _focal_loss_ref(x2, t2)

    out2 = jax.block_until_ready(
        focal_loss(x2, t2, reduction="none", min_pallas_elements=0))
    assert jnp.allclose(out2, ref2, atol=1e-5, rtol=1e-5)

    mean_k = jax.block_until_ready(
        focal_loss(x2, t2, reduction="mean", min_pallas_elements=0))
    assert jnp.allclose(mean_k, ref2.mean(), atol=1e-5, rtol=1e-5)

    sum_k = jax.block_until_ready(
        focal_loss(x2, t2, reduction="sum", min_pallas_elements=0))
    assert jnp.allclose(sum_k, ref2.sum(), atol=1e-3, rtol=1e-5)

    # Row count that does not divide the block -> masked partial tail block
    # (no wrapper-side padding or slicing anywhere).
    x3 = jax.nn.sigmoid(jax.random.normal(k5, (3, 5, 40, 128), dtype=jnp.float32))
    t3 = (jax.random.uniform(k6, (3, 5, 40, 128)) > 0.5).astype(jnp.float32)
    ref3 = _focal_loss_ref(x3, t3)
    out3 = jax.block_until_ready(
        focal_loss(x3, t3, reduction="none", min_pallas_elements=0))
    assert jnp.allclose(out3, ref3, atol=1e-5, rtol=1e-5)
    sum3 = jax.block_until_ready(
        focal_loss(x3, t3, reduction="sum", min_pallas_elements=0))
    assert jnp.allclose(sum3, ref3.sum(), atol=1e-3, rtol=1e-5)

    # Single-log fast path (valid for hard 0/1 labels only).
    out_h = jax.block_until_ready(
        focal_loss(x2, t2, reduction="none", hard_targets=True, min_pallas_elements=0))
    assert jnp.allclose(out_h, ref2, atol=1e-5, rtol=1e-5)

    print("KERNEL_OK")
</pallas_src>

<mosaic_0001>
module attributes {stable_mosaic.version = 11 : i64} {
  func.func @_focal_elementwise_kernel(%arg0: i32, %arg1: memref<4x512xf32, #tpu.memory_space<vmem>>, %arg2: memref<4x512xf32, #tpu.memory_space<vmem>>, %arg3: memref<4x512xf32, #tpu.memory_space<vmem>>) attributes {dimension_semantics = [#tpu.dimension_semantics<parallel>], iteration_bounds = array<i64: 1>, scalar_prefetch = 0 : i64, scratch_operands = 0 : i64, tpu.core_type = #tpu.core_type<tc>, window_params = [{transform_indices = @transform_0, window_bounds = array<i64: 4, 512>}, {transform_indices = @transform_1, window_bounds = array<i64: 4, 512>}, {transform_indices = @transform_2, window_bounds = array<i64: 4, 512>}]} {
    %c0 = arith.constant 0 : index
    %c0_0 = arith.constant 0 : index
    %0 = vector.load %arg1[%c0, %c0_0] : memref<4x512xf32, #tpu.memory_space<vmem>>, vector<4x512xf32>
    %c0_1 = arith.constant 0 : index
    %c0_2 = arith.constant 0 : index
    %1 = vector.load %arg2[%c0_1, %c0_2] : memref<4x512xf32, #tpu.memory_space<vmem>>, vector<4x512xf32>
    %cst = arith.constant 2.000000e+00 : f32
    %2 = vector.broadcast %cst : f32 to vector<4x512xf32>
    %3 = arith.mulf %2, %0 : vector<4x512xf32>
    %cst_3 = arith.constant 1.000000e+00 : f32
    %4 = vector.broadcast %cst_3 : f32 to vector<4x512xf32>
    %5 = arith.subf %4, %3 : vector<4x512xf32>
    %6 = arith.mulf %1, %5 : vector<4x512xf32>
    %7 = arith.addf %0, %6 : vector<4x512xf32>
    %8 = math.log %0 : vector<4x512xf32>
    %cst_4 = arith.constant -1.000000e+02 : f32
    %9 = vector.broadcast %cst_4 : f32 to vector<4x512xf32>
    %10 = arith.maximumf %8, %9 : vector<4x512xf32>
    %cst_5 = arith.constant 1.000000e+00 : f32
    %11 = vector.broadcast %cst_5 : f32 to vector<4x512xf32>
    %12 = arith.subf %11, %0 : vector<4x512xf32>
    %13 = math.log %12 : vector<4x512xf32>
    %cst_6 = arith.constant -1.000000e+02 : f32
    %14 = vector.broadcast %cst_6 : f32 to vector<4x512xf32>
    %15 = arith.maximumf %13, %14 : vector<4x512xf32>
    %16 = arith.subf %10, %15 : vector<4x512xf32>
    %17 = arith.mulf %1, %16 : vector<4x512xf32>
    %18 = arith.addf %17, %15 : vector<4x512xf32>
    %cst_7 = arith.constant 0.000000e+00 : f32
    %19 = vector.broadcast %cst_7 : f32 to vector<4x512xf32>
    %20 = arith.subf %19, %18 : vector<4x512xf32>
    %cst_8 = arith.constant -5.000000e-01 : f32
    %21 = vector.broadcast %cst_8 : f32 to vector<4x512xf32>
    %22 = arith.mulf %1, %21 : vector<4x512xf32>
    %cst_9 = arith.constant 7.500000e-01 : f32
    %23 = vector.broadcast %cst_9 : f32 to vector<4x512xf32>
    %24 = arith.addf %23, %22 : vector<4x512xf32>
    %25 = arith.mulf %7, %7 : vector<4x512xf32>
    %26 = arith.mulf %20, %24 : vector<4x512xf32>
    %27 = arith.mulf %26, %25 : vector<4x512xf32>
    %c0_10 = arith.constant 0 : index
    %c0_11 = arith.constant 0 : index
    %28 = vector.load %arg3[%c0_10, %c0_11] : memref<4x512xf32, #tpu.memory_space<vmem>>, vector<4x512xf32>
    tpu.vector_store %arg3[%c0_10, %c0_11], %27 {strides = array<i32>} : memref<4x512xf32, #tpu.memory_space<vmem>>, vector<4x512xf32>,
    return
  }
  func.func @transform_0(%arg0: i32) -> (i32, i32) {
    %c0_i32 = arith.constant 0 : i32
    %c0_i32_0 = arith.constant 0 : i32
    return %arg0, %c0_i32 : i32, i32
  }
  func.func @transform_1(%arg0: i32) -> (i32, i32) {
    %c0_i32 = arith.constant 0 : i32
    %c0_i32_0 = arith.constant 0 : i32
    return %arg0, %c0_i32 : i32, i32
  }
  func.func @transform_2(%arg0: i32) -> (i32, i32) {
    %c0_i32 = arith.constant 0 : i32
    %c0_i32_0 = arith.constant 0 : i32
    return %arg0, %c0_i32 : i32, i32
  }
}

</mosaic_0001>

<llo_original>
// kernel: tpu_custom_call.1
$region0: #{tpu_custom_call.1}
  #allocation0 [shape = 'u32[]', space=smem, size = 0x4, offset = 0x4, fixed_abs, tag = 'smem constant byte address 0x4 - core index']
  #allocation1 [shape = 'u32[144,128]{1,0:T(1,128)}', space=vmem, size = 0x12000, scoped, tag = 'internal scratch']
  %s0 = inlined_call_operand.hbm [shape: f32[4,512], index: 0, kind: input, shape index: {}]
  %s1 = inlined_call_operand.hbm [shape: f32[4,512], index: 1, kind: input, shape index: {}]
  %s2 = inlined_call_operand.hbm [shape: f32[4,512], index: 2, kind: output, shape index: {}]
  %s3 = sld [smem:[#allocation0]]
  $region26: #{tpu_custom_call.1} parent=0
    _
  %s5 = ssub.s32 1, %s3
  %s6 = scalar_select 0, %s5, %s3
  $region1: #{tpu_custom_call.1} parent=0
    #allocation2 [shape = 'u8[8192]{0}', space=vmem, size = 0x2000, scoped, tag = 'input window, operand 0, single buffered']
    #allocation3 [shape = 's32[1]{0}', space=sflag, size = 0x4, scoped, tag = 'scoped memory for tpu_custom_call.1']
    #allocation4 [shape = 's32[1]{0}', space=sflag, size = 0x4, scoped, tag = 'scoped memory for tpu_custom_call.1']
    #allocation5 [shape = 'u8[8192]{0}', space=vmem, size = 0x2000, scoped, tag = 'input window, operand 1, single buffered']
    #allocation6 [shape = 's32[1]{0}', space=sflag, size = 0x4, scoped, tag = 'scoped memory for tpu_custom_call.1']
    #allocation7 [shape = 'u8[8192]{0}', space=vmem, size = 0x2000, scoped, tag = 'output window, operand 0, single buffered']
    %7 = vsyncpa [#allocation3], 0
    %8 = vsyncpa [#allocation6], 0
    %9 = vsyncpa [#allocation4], 0
    // Predicated region
    $region2: #{tpu_custom_call.1} parent=1 // pred_check
      _
    $region3: #{tpu_custom_call.1} parent=1 // pred_check_branch
      %11 = sbr.rel (0) target = $region5
    $region4: #{tpu_custom_call.1} parent=1 // pred_region
      %s13 = ssub.s32 256, 256
      %14 = vsyncadd [#allocation3], %s13
      %s16 = sshll.u32 [#allocation2], 4
      %s17 = int_to_ptr.vmem [resolvable:$true] %s16
      %19 = dma.hbm_to_vmem [thread:$0]  %s0, 256, %s17, [#allocation3]
    $region5: #{tpu_custom_call.1} parent=1 // pred_fallthru
      _
    // Predicated region
    $region6: #{tpu_custom_call.1} parent=1 // pred_check
      _
    $region7: #{tpu_custom_call.1} parent=1 // pred_check_branch
      %21 = sbr.rel (0) target = $region9
    $region8: #{tpu_custom_call.1} parent=1 // pred_region
      %s23 = ssub.s32 256, 256
      %24 = vsyncadd [#allocation6], %s23
      %s26 = sshll.u32 [#allocation5], 4
      %s27 = int_to_ptr.vmem [resolvable:$true] %s26
      %29 = dma.hbm_to_vmem [thread:$0]  %s1, 256, %s27, [#allocation6]
    $region9: #{tpu_custom_call.1} parent=1 // pred_fallthru
      _
    // Predicated region
    $region10: #{tpu_custom_call.1} parent=1 // pred_check
      _
    $region11: #{tpu_custom_call.1} parent=1 // pred_check_branch
      %31 = sbr.rel (0) target = $region13
    $region12: #{tpu_custom_call.1} parent=1 // pred_region
      %32 = dma.done [#allocation3], 256
    $region13: #{tpu_custom_call.1} parent=1 // pred_fallthru
      _
    // Predicated region
    $region14: #{tpu_custom_call.1} parent=1 // pred_check
      _
    $region15: #{tpu_custom_call.1} parent=1 // pred_check_branch
      %34 = sbr.rel (0) target = $region17
    $region16: #{tpu_custom_call.1} parent=1 // pred_region
      %35 = dma.done [#allocation6], 256
    $region17: #{tpu_custom_call.1} parent=1 // pred_fallthru
      _
    %v36 = vld [vmem:[#allocation2] sm:$0xff]
    %v37 = vld [vmem:[#allocation2 + $0x8] sm:$0xff]
    %v38 = vld [vmem:[#allocation5] sm:$0xff]
    %v39 = vld [vmem:[#allocation5 + $0x8] sm:$0xff]
    %v40 = vmul.f32 %v36, 2.0
    %v41 = vmul.f32 %v37, 2.0
    %v42 = vsub.f32 1.0, %v40
    %v43 = vsub.f32 1.0, %v41
    %v44 = vmul.f32 %v38, %v42
    %v45 = vmul.f32 %v39, %v43
    %v46 = vadd.f32 %v36, %v44
    %v47 = vadd.f32 %v37, %v45
    %v48 = vlog2.pop %v36
    %v49 = vmul.f32 %v48, 0.6931472
    %v50 = vlog2.pop %v37
    %v51 = vmul.f32 %v50, 0.6931472
    %v52 = vmax.f32 %v49, -100.0
    %v53 = vmax.f32 %v51, -100.0
    %v54 = vsub.f32 1.0, %v36
    %v55 = vsub.f32 1.0, %v37
    %v56 = vlog2.pop %v54
    %v57 = vmul.f32 %v56, 0.6931472
    %v58 = vlog2.pop %v55
    %v59 = vmul.f32 %v58, 0.6931472
    %v60 = vmax.f32 %v57, -100.0
    %v61 = vmax.f32 %v59, -100.0
    %v62 = vsub.f32 %v52, %v60
    %v63 = vsub.f32 %v53, %v61
    %v64 = vmul.f32 %v38, %v62
    %v65 = vmul.f32 %v39, %v63
    %v66 = vadd.f32 %v64, %v60
    %v67 = vadd.f32 %v65, %v61
    %v68 = vsub.f32 0.0, %v66
    %v69 = vsub.f32 0.0, %v67
    %v70 = vmul.f32 %v38, -0.5
    %v71 = vmul.f32 %v39, -0.5
    %v72 = vadd.f32 %v70, 0.75
    %v73 = vadd.f32 %v71, 0.75
    %v74 = vmul.f32 %v46, %v46
    %v75 = vmul.f32 %v47, %v47
    %v76 = vmul.f32 %v68, %v72
    %v77 = vmul.f32 %v69, %v73
    %v78 = vmul.f32 %v76, %v74
    %v79 = vmul.f32 %v77, %v75
    %80 = vst [vmem:[#allocation7] sm:$0xff] %v78
    %81 = vst [vmem:[#allocation7 + $0x8] sm:$0xff] %v79
    // Predicated region
    $region18: #{tpu_custom_call.1} parent=1 // pred_check
      _
    $region19: #{tpu_custom_call.1} parent=1 // pred_check_branch
      %83 = sbr.rel (0) target = $region21
    $region20: #{tpu_custom_call.1} parent=1 // pred_region
      %s85 = ssub.s32 256, 256
      %86 = vsyncadd [#allocation4], %s85
      %s88 = sshll.u32 [#allocation7], 4
      %s89 = int_to_ptr.vmem [resolvable:$true] %s88
      %91 = dma.vmem_to_hbm [thread:$0]  %s89, 256, %s2, [#allocation4]
    $region21: #{tpu_custom_call.1} parent=1 // pred_fallthru
      _
    // Predicated region
    $region22: #{tpu_custom_call.1} parent=1 // pred_check
      _
    $region23: #{tpu_custom_call.1} parent=1 // pred_check_branch
      %93 = sbr.rel (0) target = $region25
    $region24: #{tpu_custom_call.1} parent=1 // pred_region
      %94 = dma.done [#allocation4], 256
    $region25: #{tpu_custom_call.1} parent=1 // pred_fallthru
      _
    %95 = vsyncpa [#allocation3], 1
    %96 = vsyncpa [#allocation6], 1
    %97 = vsyncpa [#allocation4], 1

</llo_original>
